<compile_context>
chip_gen: v7x
topology: tpu7x:2x2x1
jax: 0.10.0
libtpu: 0.0.40
codegen_flags: <defaults>
</compile_context>

<pallas_src>
import functools

import jax
import jax.numpy as jnp
from jax import lax
from jax.experimental import pallas as pl
from jax.experimental.pallas import tpu as pltpu


def _round_up(x, m):
    return (x + m - 1) // m * m


def _kmeans_kernel(x_ref, out_ref, c_ref, cneg_ref, cn_ref, acc_ref, cnt_ref,
                   *, k_pad, d_pad, num_classes, n_rows, tile_n):
    """One (iteration, row-tile) grid step of Lloyd's algorithm.

    x_ref   : (tile_n, d_pad)  bf16  lane-dense row tile of the embeddings
    out_ref : (k_pad, d_pad)   f32   final centroids (written once, at end)
    c_ref   : (k_pad, d_pad)   f32   current centroids            (persistent)
    cneg_ref: (k_pad, d_pad)   bf16  -2*c, hoisted per iteration  (persistent)
    cn_ref  : (8, k_pad)       f32   ||c||^2 row layout, hoisted  (persistent)
    acc_ref : (k_pad, d_pad)   f32   per-pass cluster-sum accumulator
    cnt_ref : (1, k_pad)       f32   per-pass cluster-count accumulator
    """
    it = pl.program_id(0)
    j = pl.program_id(1)
    n_iters = pl.num_programs(0)
    n_tiles = pl.num_programs(1)

    x = x_ref[...]                                        # (tile_n, d_pad) bf16

    # Deterministic init from the first k_pad data rows (tile 0 contains them).
    @pl.when(jnp.logical_and(it == 0, j == 0))
    def _():
        c_ref[...] = x[:k_pad, :].astype(jnp.float32)

    # Hoisted, row-tile-invariant centroid prep + accumulator reset: once per
    # full pass over the data instead of once per tile.
    @pl.when(j == 0)
    def _():
        c = c_ref[...]
        cneg_ref[...] = (-2.0 * c).astype(jnp.bfloat16)
        # ||c||^2 in row (lane) layout via a tiny matmul: ones @ (c*c)^T.
        ones8 = jnp.ones((8, d_pad), jnp.float32)
        cn_ref[...] = lax.dot_general(
            ones8, c * c, (((1,), (1,)), ((), ())),
            preferred_element_type=jnp.float32)           # (8, k_pad)
        acc_ref[...] = jnp.zeros_like(acc_ref)
        cnt_ref[...] = jnp.zeros_like(cnt_ref)

    # ---- assignment on the MXU: argmin_c ( -2 x.c + ||c||^2 ) --------------
    dist = lax.dot_general(
        x, cneg_ref[...], (((1,), (1,)), ((), ())),
        preferred_element_type=jnp.float32)               # (tile_n, k_pad)
    dist = dist + cn_ref[...][0:1, :]                     # broadcast row (VPU)

    col = lax.broadcasted_iota(jnp.int32, dist.shape, 1)
    # Padded (dead) clusters never win the argmin (mask applied post-matmul,
    # in f32, so the 3e38 sentinel never meets a bf16 cast).
    dist = jnp.where(col >= num_classes, jnp.float32(3e38), dist)

    # argmin along lanes with lowest-index tie-break (no 1-D argmin needed).
    min_d = jnp.min(dist, axis=-1, keepdims=True)
    assign = jnp.min(jnp.where(dist <= min_d, col, k_pad),
                     axis=-1, keepdims=True)              # (tile_n, 1) int32

    # Padded tail rows of the last tile must not contribute to sums/counts.
    row = lax.broadcasted_iota(jnp.int32, dist.shape, 0) + j * tile_n
    onehot = jnp.where(jnp.logical_and(col == assign, row < n_rows),
                       jnp.float32(1.0), jnp.float32(0.0))  # (tile_n, k_pad)

    # ---- per-cluster sums (bf16 MXU, f32 accumulate) + counts ----------------
    acc_ref[...] += lax.dot_general(
        onehot.astype(jnp.bfloat16), x, (((0,), (0,)), ((), ())),
        preferred_element_type=jnp.float32)               # (k_pad, d_pad)
    cnt_ref[...] += jnp.sum(onehot, axis=0, keepdims=True)  # (1, k_pad)

    # ---- centroid update only at the end of a full pass over the data ------
    @pl.when(j == n_tiles - 1)
    def _():
        cnt_row = cnt_ref[...]                            # (1, k_pad)
        # Row -> column relayout of the counts via a masked-diagonal lane
        # reduce (cheap, once per pass; avoids a small unsupported transpose).
        ri = lax.broadcasted_iota(jnp.int32, (k_pad, k_pad), 0)
        ci = lax.broadcasted_iota(jnp.int32, (k_pad, k_pad), 1)
        cnt_col = jnp.sum(
            jnp.where(ri == ci, jnp.broadcast_to(cnt_row, (k_pad, k_pad)), 0.0),
            axis=1, keepdims=True)                        # (k_pad, 1)
        c_old = c_ref[...]
        c_ref[...] = jnp.where(cnt_col > 0.5,
                               acc_ref[...] / jnp.maximum(cnt_col, 1.0),
                               c_old)                     # keep empty clusters

    @pl.when(jnp.logical_and(j == n_tiles - 1, it == n_iters - 1))
    def _():
        out_ref[...] = c_ref[...]


def initialize_forward(test_emb, num_classes, num_iters=20):
    """Pallas equivalent of Initialize(num_classes).forward(test_emb)."""
    test_emb = jnp.asarray(test_emb, jnp.float32)
    n, d = test_emb.shape
    if n < num_classes:
        raise ValueError("need at least num_classes samples")

    # Lane/sublane-dense padded sizes.
    k_pad = max(8, _round_up(num_classes, 8))
    d_pad = max(128, _round_up(d, 128))

    # Generation-aware VMEM budget (v5e/v6e: 128 MiB physical, v7x: 64 MiB).
    try:
        vmem_cap = int(pltpu.get_tpu_info().vmem_capacity_bytes)
    except Exception:
        vmem_cap = 64 << 20                               # conservative fallback
    vmem_budget = min(int(0.70 * vmem_cap), vmem_cap - (8 << 20))

    # Row-tile size: as large as the budget allows.  When the whole dataset
    # fits, there is a single row tile with a constant block index, so the
    # data is DMA'd once and stays VMEM-resident across all iterations.
    n_pad8 = _round_up(n, 8)
    fixed_bytes = (k_pad * d_pad * (4 + 2 + 4)            # c, cneg, acc scratch
                   + 2 * k_pad * d_pad * 4                # output block buffers
                   + 2 * 8 * k_pad * 4                    # cn / cnt scratch
                   + (2 << 20))                           # headroom
    bytes_per_row = 2 * d_pad * 2                         # double-buffered bf16
    rows_budget = (vmem_budget - fixed_bytes) // bytes_per_row
    rows_budget = max(k_pad, (rows_budget // 8) * 8)
    tile_n = max(k_pad, min(n_pad8, rows_budget))
    n_pad = _round_up(n, tile_n)
    n_tiles = n_pad // tile_n
    assert tile_n >= k_pad and tile_n % 8 == 0

    # Lane-dense bf16 embeddings in HBM (zero padded rows/cols).
    xb = jnp.zeros((n_pad, d_pad), jnp.bfloat16)
    xb = xb.at[:n, :d].set(test_emb.astype(jnp.bfloat16))

    kernel = functools.partial(
        _kmeans_kernel, k_pad=k_pad, d_pad=d_pad, num_classes=num_classes,
        n_rows=n, tile_n=tile_n)

    vmem_need = 2 * tile_n * d_pad * 2 + fixed_bytes
    vmem_limit = int(min(max(vmem_budget, vmem_need + (2 << 20)),
                         vmem_cap - (4 << 20)))

    out = pl.pallas_call(
        kernel,
        out_shape=jax.ShapeDtypeStruct((k_pad, d_pad), jnp.float32),
        grid_spec=pltpu.PrefetchScalarGridSpec(
            num_scalar_prefetch=0,
            grid=(num_iters, n_tiles),
            in_specs=[pl.BlockSpec((tile_n, d_pad), lambda it, j: (j, 0))],
            out_specs=pl.BlockSpec((k_pad, d_pad), lambda it, j: (0, 0)),
            scratch_shapes=[pltpu.VMEM((k_pad, d_pad), jnp.float32),    # c
                            pltpu.VMEM((k_pad, d_pad), jnp.bfloat16),   # -2c
                            pltpu.VMEM((8, k_pad), jnp.float32),        # ||c||^2
                            pltpu.VMEM((k_pad, d_pad), jnp.float32),    # sums
                            pltpu.VMEM((1, k_pad), jnp.float32)]),      # counts
        compiler_params=pltpu.CompilerParams(
            dimension_semantics=("arbitrary", "arbitrary"),
            vmem_limit_bytes=vmem_limit),
    )(xb)
    return out[:num_classes, :d]


def _kmeans_reference(x, num_classes, num_iters):
    """Pure-JAX f32 Lloyd reference with the same deterministic init."""
    c = x[:num_classes]
    for _ in range(num_iters):
        dist = jnp.sum((x[:, None, :] - c[None, :, :]) ** 2, axis=-1)
        onehot = jax.nn.one_hot(jnp.argmin(dist, axis=-1), num_classes,
                                dtype=jnp.float32)
        counts = onehot.sum(axis=0)[:, None]
        sums = onehot.T @ x
        c = jnp.where(counts > 0.5, sums / jnp.maximum(counts, 1.0), c)
    return c


if __name__ == "__main__":
    key = jax.random.PRNGKey(0)
    num_classes = 4
    n_samples, emb_dim = 64, 32

    # Synthetic embeddings: 4 gaussian blobs so the centroids are meaningful.
    k_centers, k_noise = jax.random.split(key)
    true_centers = 4.0 * jax.random.normal(k_centers, (num_classes, emb_dim))
    labels = jnp.arange(n_samples) % num_classes
    test_emb = (true_centers[labels]
                + 0.3 * jax.random.normal(k_noise, (n_samples, emb_dim)))
    test_emb = jnp.asarray(test_emb, jnp.float32)        # (N, D)

    centroids = initialize_forward(test_emb, num_classes)
    centroids = jax.block_until_ready(centroids)

    assert centroids.shape == (num_classes, emb_dim)
    assert centroids.dtype == jnp.float32
    assert bool(jnp.all(jnp.isfinite(centroids)))

    ref = _kmeans_reference(test_emb, num_classes, 20)
    assert bool(jnp.max(jnp.abs(centroids - ref)) < 0.1)
    print("KERNEL_OK")
</pallas_src>

<mosaic_0001>
module attributes {stable_mosaic.version = 11 : i64} {
  func.func @_kmeans_kernel(%arg0: i32, %arg1: i32, %arg2: memref<64x128xbf16, #tpu.memory_space<vmem>>, %arg3: memref<8x128xf32, #tpu.memory_space<vmem>>, %arg4: memref<8x128xf32, #tpu.memory_space<vmem>>, %arg5: memref<8x128xbf16, #tpu.memory_space<vmem>>, %arg6: memref<8x8xf32, #tpu.memory_space<vmem>>, %arg7: memref<8x128xf32, #tpu.memory_space<vmem>>, %arg8: memref<1x8xf32, #tpu.memory_space<vmem>>) attributes {dimension_semantics = [#tpu.dimension_semantics<arbitrary>, #tpu.dimension_semantics<arbitrary>], iteration_bounds = array<i64: 20, 1>, scalar_prefetch = 0 : i64, scratch_operands = 5 : i64, tpu.core_type = #tpu.core_type<tc>, window_params = [{transform_indices = @transform_0, window_bounds = array<i64: 64, 128>}, {pipeline_mode = #tpu.pipeline_mode<synchronous>, transform_indices = @transform_1, window_bounds = array<i64: 8, 128>}]} {
    %c0 = arith.constant 0 : index
    %c0_0 = arith.constant 0 : index
    %0 = vector.load %arg2[%c0, %c0_0] : memref<64x128xbf16, #tpu.memory_space<vmem>>, vector<64x128xbf16>
    %c0_i32 = arith.constant 0 : i32
    %1 = arith.cmpi eq, %arg0, %c0_i32 : i32
    %c0_i32_1 = arith.constant 0 : i32
    %2 = arith.cmpi eq, %arg1, %c0_i32_1 : i32
    %3 = arith.andi %1, %2 : i1
    %4 = arith.extui %3 : i1 to i32
    %c0_i32_2 = arith.constant 0 : i32
    %5 = arith.cmpi ne, %4, %c0_i32_2 : i32
    scf.if %5 {
      %58 = vector.extract_strided_slice %0 {offsets = [0, 0], sizes = [8, 128], strides = [1, 1]} : vector<64x128xbf16> to vector<8x128xbf16>
      %59 = arith.extf %58 : vector<8x128xbf16> to vector<8x128xf32>
      %c0_29 = arith.constant 0 : index
      %c0_30 = arith.constant 0 : index
      %60 = vector.load %arg4[%c0_29, %c0_30] : memref<8x128xf32, #tpu.memory_space<vmem>>, vector<8x128xf32>
      tpu.vector_store %arg4[%c0_29, %c0_30], %59 {strides = array<i32>} : memref<8x128xf32, #tpu.memory_space<vmem>>, vector<8x128xf32>,
    } else {
    }
    %c0_i32_3 = arith.constant 0 : i32
    %6 = arith.cmpi eq, %arg1, %c0_i32_3 : i32
    %7 = arith.extui %6 : i1 to i32
    %c0_i32_4 = arith.constant 0 : i32
    %8 = arith.cmpi ne, %7, %c0_i32_4 : i32
    scf.if %8 {
      %c0_29 = arith.constant 0 : index
      %c0_30 = arith.constant 0 : index
      %58 = vector.load %arg4[%c0_29, %c0_30] : memref<8x128xf32, #tpu.memory_space<vmem>>, vector<8x128xf32>
      %cst_31 = arith.constant -2.000000e+00 : f32
      %59 = vector.broadcast %cst_31 : f32 to vector<8x128xf32>
      %60 = arith.mulf %59, %58 : vector<8x128xf32>
      %61 = arith.truncf %60 : vector<8x128xf32> to vector<8x128xbf16>
      %c0_32 = arith.constant 0 : index
      %c0_33 = arith.constant 0 : index
      %62 = vector.load %arg5[%c0_32, %c0_33] : memref<8x128xbf16, #tpu.memory_space<vmem>>, vector<8x128xbf16>
      tpu.vector_store %arg5[%c0_32, %c0_33], %61 {strides = array<i32>} : memref<8x128xbf16, #tpu.memory_space<vmem>>, vector<8x128xbf16>,
      %cst_34 = arith.constant 1.000000e+00 : f32
      %63 = vector.broadcast %cst_34 : f32 to vector<8x128xf32>
      %64 = arith.mulf %58, %58 : vector<8x128xf32>
      %cst_35 = arith.constant dense<0.000000e+00> : vector<8x8xf32>
      %65 = tpu.matmul %63, %64, %cst_35 {dimension_numbers = #tpu.dot_dimension_numbers<[1], [1], [0], [0], [0, 0, 1, 0], [], []>} : vector<8x128xf32>, vector<8x128xf32>, vector<8x8xf32> -> vector<8x8xf32>
      %c0_36 = arith.constant 0 : index
      %c0_37 = arith.constant 0 : index
      %66 = vector.load %arg6[%c0_36, %c0_37] : memref<8x8xf32, #tpu.memory_space<vmem>>, vector<8x8xf32>
      tpu.vector_store %arg6[%c0_36, %c0_37], %65 {strides = array<i32>} : memref<8x8xf32, #tpu.memory_space<vmem>>, vector<8x8xf32>,
      %cst_38 = arith.constant 0.000000e+00 : f32
      %67 = vector.broadcast %cst_38 : f32 to vector<8x128xf32>
      %c0_39 = arith.constant 0 : index
      %c0_40 = arith.constant 0 : index
      %68 = vector.load %arg7[%c0_39, %c0_40] : memref<8x128xf32, #tpu.memory_space<vmem>>, vector<8x128xf32>
      tpu.vector_store %arg7[%c0_39, %c0_40], %67 {strides = array<i32>} : memref<8x128xf32, #tpu.memory_space<vmem>>, vector<8x128xf32>,
      %cst_41 = arith.constant 0.000000e+00 : f32
      %69 = vector.broadcast %cst_41 : f32 to vector<1x8xf32>
      %c0_42 = arith.constant 0 : index
      %c0_43 = arith.constant 0 : index
      %70 = vector.load %arg8[%c0_42, %c0_43] : memref<1x8xf32, #tpu.memory_space<vmem>>, vector<1x8xf32>
      tpu.vector_store %arg8[%c0_42, %c0_43], %69 {strides = array<i32>} : memref<1x8xf32, #tpu.memory_space<vmem>>, vector<1x8xf32>,
    } else {
    }
    %c0_5 = arith.constant 0 : index
    %c0_6 = arith.constant 0 : index
    %9 = vector.load %arg5[%c0_5, %c0_6] : memref<8x128xbf16, #tpu.memory_space<vmem>>, vector<8x128xbf16>
    %cst = arith.constant dense<0.000000e+00> : vector<64x8xf32>
    %10 = tpu.matmul %0, %9, %cst {dimension_numbers = #tpu.dot_dimension_numbers<[1], [1], [0], [0], [0, 0, 1, 0], [], []>} : vector<64x128xbf16>, vector<8x128xbf16>, vector<64x8xf32> -> vector<64x8xf32>
    %c0_7 = arith.constant 0 : index
    %c0_8 = arith.constant 0 : index
    %11 = vector.load %arg6[%c0_7, %c0_8] : memref<8x8xf32, #tpu.memory_space<vmem>>, vector<8x8xf32>
    %12 = vector.extract_strided_slice %11 {offsets = [0, 0], sizes = [1, 8], strides = [1, 1]} : vector<8x8xf32> to vector<1x8xf32>
    %13 = vector.broadcast %12 : vector<1x8xf32> to vector<64x8xf32>
    %14 = arith.addf %10, %13 : vector<64x8xf32>
    %15 = tpu.iota {dimensions = array<i32: 1>} : vector<64x8xi32>
    %c4_i32 = arith.constant 4 : i32
    %16 = vector.broadcast %c4_i32 : i32 to vector<64x8xi32>
    %17 = arith.cmpi sge, %15, %16 : vector<64x8xi32>
    %cst_9 = arith.constant 3.000000e+38 : f32
    %18 = vector.broadcast %cst_9 : f32 to vector<64x8xf32>
    %19 = arith.select %17, %18, %14 : vector<64x8xi1>, vector<64x8xf32>
    %cst_10 = arith.constant dense<0x7F800000> : vector<64xf32>
    %20 = vector.multi_reduction <minimumf>, %19, %cst_10 [1] : vector<64x8xf32> to vector<64xf32>
    %21 = vector.shape_cast %20 : vector<64xf32> to vector<64x1xf32>
    %22 = vector.broadcast %21 : vector<64x1xf32> to vector<64x8xf32>
    %23 = arith.cmpf ole, %19, %22 : vector<64x8xf32>
    %c8_i32 = arith.constant 8 : i32
    %24 = vector.broadcast %c8_i32 : i32 to vector<64x8xi32>
    %25 = arith.select %23, %15, %24 : vector<64x8xi1>, vector<64x8xi32>
    %cst_11 = arith.constant dense<2147483647> : vector<64xi32>
    %26 = vector.multi_reduction <minsi>, %25, %cst_11 [1] : vector<64x8xi32> to vector<64xi32>
    %27 = vector.shape_cast %26 : vector<64xi32> to vector<64x1xi32>
    %28 = tpu.iota {dimensions = array<i32: 0>} : vector<64x8xi32>
    %c64_i32 = arith.constant 64 : i32
    %29 = arith.muli %arg1, %c64_i32 : i32
    %30 = vector.broadcast %29 : i32 to vector<64x8xi32>
    %31 = arith.addi %28, %30 : vector<64x8xi32>
    %32 = vector.broadcast %27 : vector<64x1xi32> to vector<64x8xi32>
    %33 = arith.cmpi eq, %15, %32 : vector<64x8xi32>
    %c64_i32_12 = arith.constant 64 : i32
    %34 = vector.broadcast %c64_i32_12 : i32 to vector<64x8xi32>
    %35 = arith.cmpi slt, %31, %34 : vector<64x8xi32>
    %36 = arith.andi %33, %35 : vector<64x8xi1>
    %cst_13 = arith.constant 1.000000e+00 : f32
    %cst_14 = arith.constant 0.000000e+00 : f32
    %37 = vector.broadcast %cst_13 : f32 to vector<64x8xf32>
    %38 = vector.broadcast %cst_14 : f32 to vector<64x8xf32>
    %39 = arith.select %36, %37, %38 : vector<64x8xi1>, vector<64x8xf32>
    %c0_15 = arith.constant 0 : index
    %c0_16 = arith.constant 0 : index
    %40 = vector.load %arg7[%c0_15, %c0_16] : memref<8x128xf32, #tpu.memory_space<vmem>>, vector<8x128xf32>
    %41 = arith.truncf %39 : vector<64x8xf32> to vector<64x8xbf16>
    %cst_17 = arith.constant dense<0.000000e+00> : vector<8x128xf32>
    %42 = tpu.matmul %41, %0, %cst_17 {dimension_numbers = #tpu.dot_dimension_numbers<[0], [0], [1], [1], [0, 1, 1, 1], [], []>} : vector<64x8xbf16>, vector<64x128xbf16>, vector<8x128xf32> -> vector<8x128xf32>
    %43 = arith.addf %40, %42 : vector<8x128xf32>
    %c0_18 = arith.constant 0 : index
    %c0_19 = arith.constant 0 : index
    %44 = vector.load %arg7[%c0_18, %c0_19] : memref<8x128xf32, #tpu.memory_space<vmem>>, vector<8x128xf32>
    tpu.vector_store %arg7[%c0_18, %c0_19], %43 {strides = array<i32>} : memref<8x128xf32, #tpu.memory_space<vmem>>, vector<8x128xf32>,
    %c0_20 = arith.constant 0 : index
    %c0_21 = arith.constant 0 : index
    %45 = vector.load %arg8[%c0_20, %c0_21] : memref<1x8xf32, #tpu.memory_space<vmem>>, vector<1x8xf32>
    %cst_22 = arith.constant dense<0.000000e+00> : vector<8xf32>
    %46 = vector.multi_reduction <add>, %39, %cst_22 [0] : vector<64x8xf32> to vector<8xf32>
    %47 = vector.shape_cast %46 : vector<8xf32> to vector<1x8xf32>
    %48 = arith.addf %45, %47 : vector<1x8xf32>
    %c0_23 = arith.constant 0 : index
    %c0_24 = arith.constant 0 : index
    %49 = vector.load %arg8[%c0_23, %c0_24] : memref<1x8xf32, #tpu.memory_space<vmem>>, vector<1x8xf32>
    tpu.vector_store %arg8[%c0_23, %c0_24], %48 {strides = array<i32>} : memref<1x8xf32, #tpu.memory_space<vmem>>, vector<1x8xf32>,
    %c0_i32_25 = arith.constant 0 : i32
    %50 = arith.cmpi eq, %arg1, %c0_i32_25 : i32
    %51 = arith.extui %50 : i1 to i32
    %c0_i32_26 = arith.constant 0 : i32
    %52 = arith.cmpi ne, %51, %c0_i32_26 : i32
    scf.if %52 {
      %c0_29 = arith.constant 0 : index
      %c0_30 = arith.constant 0 : index
      %58 = vector.load %arg8[%c0_29, %c0_30] : memref<1x8xf32, #tpu.memory_space<vmem>>, vector<1x8xf32>
      %59 = tpu.iota {dimensions = array<i32: 0>} : vector<8x8xi32>
      %60 = tpu.iota {dimensions = array<i32: 1>} : vector<8x8xi32>
      %61 = arith.cmpi eq, %59, %60 : vector<8x8xi32>
      %62 = vector.shape_cast %58 : vector<1x8xf32> to vector<1x8xf32>
      %63 = vector.broadcast %62 : vector<1x8xf32> to vector<8x8xf32>
      %cst_31 = arith.constant 0.000000e+00 : f32
      %64 = vector.broadcast %cst_31 : f32 to vector<8x8xf32>
      %65 = arith.select %61, %63, %64 : vector<8x8xi1>, vector<8x8xf32>
      %cst_32 = arith.constant dense<0.000000e+00> : vector<8xf32>
      %66 = vector.multi_reduction <add>, %65, %cst_32 [1] : vector<8x8xf32> to vector<8xf32>
      %67 = vector.shape_cast %66 : vector<8xf32> to vector<8x1xf32>
      %c0_33 = arith.constant 0 : index
      %c0_34 = arith.constant 0 : index
      %68 = vector.load %arg4[%c0_33, %c0_34] : memref<8x128xf32, #tpu.memory_space<vmem>>, vector<8x128xf32>
      %cst_35 = arith.constant 5.000000e-01 : f32
      %69 = vector.broadcast %cst_35 : f32 to vector<8x1xf32>
      %70 = arith.cmpf ogt, %67, %69 : vector<8x1xf32>
      %c0_36 = arith.constant 0 : index
      %c0_37 = arith.constant 0 : index
      %71 = vector.load %arg7[%c0_36, %c0_37] : memref<8x128xf32, #tpu.memory_space<vmem>>, vector<8x128xf32>
      %cst_38 = arith.constant 1.000000e+00 : f32
      %72 = vector.broadcast %cst_38 : f32 to vector<8x1xf32>
      %73 = arith.maximumf %67, %72 : vector<8x1xf32>
      %74 = vector.broadcast %73 : vector<8x1xf32> to vector<8x128xf32>
      %75 = arith.divf %71, %74 : vector<8x128xf32>
      %76 = vector.shape_cast %70 : vector<8x1xi1> to vector<8x1xi1>
      %77 = vector.broadcast %76 : vector<8x1xi1> to vector<8x128xi1>
      %78 = arith.select %77, %75, %68 : vector<8x128xi1>, vector<8x128xf32>
      %c0_39 = arith.constant 0 : index
      %c0_40 = arith.constant 0 : index
      %79 = vector.load %arg4[%c0_39, %c0_40] : memref<8x128xf32, #tpu.memory_space<vmem>>, vector<8x128xf32>
      tpu.vector_store %arg4[%c0_39, %c0_40], %78 {strides = array<i32>} : memref<8x128xf32, #tpu.memory_space<vmem>>, vector<8x128xf32>,
    } else {
    }
    %c0_i32_27 = arith.constant 0 : i32
    %53 = arith.cmpi eq, %arg1, %c0_i32_27 : i32
    %c19_i32 = arith.constant 19 : i32
    %54 = arith.cmpi eq, %arg0, %c19_i32 : i32
    %55 = arith.andi %53, %54 : i1
    %56 = arith.extui %55 : i1 to i32
    %c0_i32_28 = arith.constant 0 : i32
    %57 = arith.cmpi ne, %56, %c0_i32_28 : i32
    scf.if %57 {
      %c0_29 = arith.constant 0 : index
      %c0_30 = arith.constant 0 : index
      %58 = vector.load %arg4[%c0_29, %c0_30] : memref<8x128xf32, #tpu.memory_space<vmem>>, vector<8x128xf32>
      %c0_31 = arith.constant 0 : index
      %c0_32 = arith.constant 0 : index
      %59 = vector.load %arg3[%c0_31, %c0_32] : memref<8x128xf32, #tpu.memory_space<vmem>>, vector<8x128xf32>
      tpu.vector_store %arg3[%c0_31, %c0_32], %58 {strides = array<i32>} : memref<8x128xf32, #tpu.memory_space<vmem>>, vector<8x128xf32>,
    } else {
    }
    return
  }
  func.func @transform_0(%arg0: i32, %arg1: i32) -> (i32, i32) {
    %c0_i32 = arith.constant 0 : i32
    %c0_i32_0 = arith.constant 0 : i32
    return %arg1, %c0_i32 : i32, i32
  }
  func.func @transform_1(%arg0: i32, %arg1: i32) -> (i32, i32) {
    %c0_i32 = arith.constant 0 : i32
    %c0_i32_0 = arith.constant 0 : i32
    %c0_i32_1 = arith.constant 0 : i32
    return %c0_i32, %c0_i32_0 : i32, i32
  }
}

</mosaic_0001>

<llo_original>
// kernel: tpu_custom_call.1
$region0: #{tpu_custom_call.1}
  #allocation0 [shape = 'u32[]', space=smem, size = 0x4, offset = 0x4, fixed_abs, tag = 'smem constant byte address 0x4 - core index']
  #allocation1 [shape = 'u32[144,128]{1,0:T(1,128)}', space=vmem, size = 0x12000, scoped, tag = 'internal scratch']
  #allocation2 [shape = 'f32[8,128]{1,0:T(8,128)}', space=vmem, size = 0x1000, scoped, tag = 'scratch operand']
  #allocation3 [shape = 'bf16[8,128]{1,0:T(8,128)(2,1)}', space=vmem, size = 0x800, scoped, tag = 'scratch operand']
  #allocation4 [shape = 'f32[8,8]{1,0:T(8,128)}', space=vmem, size = 0x1000, scoped, tag = 'scratch operand']
  #allocation5 [shape = 'f32[8,128]{1,0:T(8,128)}', space=vmem, size = 0x1000, scoped, tag = 'scratch operand']
  #allocation6 [shape = 'f32[1,8]{1,0:T(1,128)}', space=vmem, size = 0x200, scoped, tag = 'scratch operand']
  %s0 = inlined_call_operand.hbm [shape: bf16[64,128], index: 0, kind: input, shape index: {}]
  %s1 = inlined_call_operand.hbm [shape: f32[8,128], index: 1, kind: output, shape index: {}]
  %s2 = sld [smem:[#allocation0]]
  $region57: #{tpu_custom_call.1} parent=0
    _
  %s4 = ssub.s32 1, %s2
  %s5 = scalar_select 0, %s4, %s2
  $region1: #{tpu_custom_call.1} parent=0
    #allocation7 [shape = 'u8[16384]{0}', space=vmem, size = 0x4000, scoped, tag = 'input window, operand 0, single buffered']
    #allocation8 [shape = 's32[2]{0}', space=sflag, size = 0x8, scoped, tag = 'scoped memory for tpu_custom_call.1']
    #allocation9 [shape = 's32[2]{0}', space=sflag, size = 0x8, scoped, tag = 'scoped memory for tpu_custom_call.1']
    #allocation10 [shape = 'u8[4096]{0}', space=vmem, size = 0x1000, scoped, tag = 'output window, operand 0, single buffered']
    %6 = vsyncpa [#allocation8], 0
    %7 = vsyncpa [#allocation9], 0
    loop: start=0, step=1, limit=22
    $region2: #{tpu_custom_call.1} parent=1 // loop_pre_header
      _
    $region3: #{tpu_custom_call.1} parent=1 // loop_header
      %s9 = sphi 0, %s13
      %p10 = scmp.ge.s32.totalorder %s9, 22
      %s16 = sphi 0, %s28
      %s17 = sphi 0, %s24
      %s18 = sphi 0, %s16
      %s19 = sphi 0, %s17
      %s20 = sphi 0, %s18
      %s21 = sphi 0, %s19
      %s31 = sphi 0, %s33
      %s34 = sphi 0, %s31
      %s35 = sphi 0, %s34
      %s51 = sphi 0, %s35
      %s55 = sphi 0, %s55
      %s57 = sphi 0, %s55
      %s58 = sphi 0, %s57
      %s72 = sphi 0, %s58
    $region4: #{tpu_custom_call.1} parent=1 // loop_header_branch
      %12 = sbr.rel (%p10) target = $region8
    $region5: #{tpu_custom_call.1} parent=1 // loop_body
      %s14 = ssub.s32 %s9, 1
      %s15 = ssub.s32 %s9, 2
      %s22 = sadd.s32 1, %s17
      %p23 = scmp.ge.s32.totalorder %s22, 1
      %s24 = scalar_select %p23, 0, %s22
      %s25 = sadd.s32 1, %s16
      %s26 = scalar_select %p23, %s25, %s16
      %p27 = scmp.ge.s32.totalorder %s26, 20
      %s28 = scalar_select %p27, 0, %s26
      %s29 = ssub.s32 %s17, %s24
      %p30 = scmp.eq.s32.totalorder %s29, 0
      %s32 = sadd.s32 %s31, 1
      %s33 = scalar_select %p30, %s31, %s32
      %p36 = pneg %p30
      %p37 = scmp.eq.s32.totalorder %s9, 19
      %p38 = por %p36, %p37
      %p39 = scmp.ne.s32.totalorder %s31, %s34
      %p40 = scmp.eq.s32.totalorder %s9, 0
      %p41 = por %p39, %p40
      %p42 = scmp.ne.s32.totalorder %s31, %s34
      %p43 = scmp.eq.s32.totalorder %s14, 19
      %p44 = por %p42, %p43
      %p45 = scmp.ne.s32.totalorder %s34, %s35
      %p46 = scmp.eq.s32.totalorder %s14, 0
      %p47 = por %p45, %p46
      %p48 = scmp.ne.s32.totalorder %s34, %s35
      %p49 = scmp.eq.s32.totalorder %s15, 19
      %p50 = por %p48, %p49
      %p52 = scmp.ne.s32.totalorder %s35, %s51
      %p53 = scmp.eq.s32.totalorder %s15, 0
      %p54 = por %p52, %p53
      %s56 = sadd.s32 %s55, 1
      %p59 = scmp.eq.s32.totalorder %s9, 19
      %p60 = scmp.ne.s32.totalorder %s55, %s57
      %p61 = scmp.eq.s32.totalorder %s9, 0
      %p62 = por %p60, %p61
      %p63 = scmp.ne.s32.totalorder %s55, %s57
      %p64 = scmp.eq.s32.totalorder %s14, 19
      %p65 = por %p63, %p64
      %p66 = scmp.ne.s32.totalorder %s57, %s58
      %p67 = scmp.eq.s32.totalorder %s14, 0
      %p68 = por %p66, %p67
      %p69 = scmp.ne.s32.totalorder %s57, %s58
      %p70 = scmp.eq.s32.totalorder %s15, 19
      %p71 = por %p69, %p70
      %p73 = scmp.ne.s32.totalorder %s58, %s72
      %p74 = scmp.eq.s32.totalorder %s15, 0
      %p75 = por %p73, %p74
      %p76 = scmp.le.s32.totalorder 1, %s9
      %p77 = scmp.lt.s32.totalorder %s9, 21
      %p78 = pnand %p76, %p77
      %p79 = pneg %p78
      // Predicated region
      $region9: #{tpu_custom_call.1} parent=5 // pred_check
        _
      $region10: #{tpu_custom_call.1} parent=5 // pred_check_branch
        %81 = sbr.rel (%p78) target = $region12
      $region11: #{tpu_custom_call.1} parent=5 // pred_region
        %s82 = ssub.s32 %s9, 1
        // Predicated region
        $region13: #{tpu_custom_call.1} parent=11 // pred_check
          %p83 = pneg %p47
        $region14: #{tpu_custom_call.1} parent=11 // pred_check_branch
          %85 = sbr.rel (%p83) target = $region16
        $region15: #{tpu_custom_call.1} parent=11 // pred_region
          %s86 = smul.u32 8, %s19
          %s88 = ssub.s32 512, 512
          %89 = vsyncadd [#allocation8], %s88
          %s90 = smul.addr %s86, 64
          %s91 = scalar_lea.hbm %s0, %s90
          %s92 = sshll.u32 [#allocation7], 4
          %s93 = int_to_ptr.vmem [resolvable:$true] %s92
          %98 = dma.hbm_to_vmem [thread:$0]  %s91, 512, %s93, [#allocation8], 64, 64, 4
        $region16: #{tpu_custom_call.1} parent=11 // pred_fallthru
          _
      $region12: #{tpu_custom_call.1} parent=5 // pred_fallthru
        _
      %p99 = scmp.lt.s32.totalorder %s9, 20
      // Predicated region
      $region17: #{tpu_custom_call.1} parent=5 // pred_check
        %p100 = pneg %p99
      $region18: #{tpu_custom_call.1} parent=5 // pred_check_branch
        %102 = sbr.rel (%p100) target = $region20
      $region19: #{tpu_custom_call.1} parent=5 // pred_region
        _
      $region20: #{tpu_custom_call.1} parent=5 // pred_fallthru
        _
      %p103 = scmp.le.s32.totalorder 1, %s9
      %p104 = scmp.lt.s32.totalorder %s9, 21
      %p105 = pnand %p103, %p104
      %p106 = pneg %p105
      // Predicated region
      $region21: #{tpu_custom_call.1} parent=5 // pred_check
        _
      $region22: #{tpu_custom_call.1} parent=5 // pred_check_branch
        %108 = sbr.rel (%p105) target = $region24
      $region23: #{tpu_custom_call.1} parent=5 // pred_region
        %s109 = ssub.s32 %s9, 1
        // Predicated region
        $region25: #{tpu_custom_call.1} parent=23 // pred_check
          %p110 = pneg %p47
        $region26: #{tpu_custom_call.1} parent=23 // pred_check_branch
          %112 = sbr.rel (%p110) target = $region28
        $region27: #{tpu_custom_call.1} parent=23 // pred_region
          %113 = dma.done [#allocation8], 512
        $region28: #{tpu_custom_call.1} parent=23 // pred_fallthru
          _
        %p114 = pneg %p47
        %p115 = pneg %p44
        %p116 = pneg %p68
        %p117 = pneg %p65
        %s118 = smul.u32 8, %s19
        %v120 = vld [vmem:[#allocation7] sm:$0xf]
        %v121 = vld [vmem:[#allocation7 + $0x4] sm:$0xf]
        %v122 = vld [vmem:[#allocation7 + $0x8] sm:$0xf]
        %v123 = vld [vmem:[#allocation7 + $0xc] sm:$0xf]
        %v124 = vld [vmem:[#allocation7 + $0x10] sm:$0xf]
        %v125 = vld [vmem:[#allocation7 + $0x14] sm:$0xf]
        %v126 = vld [vmem:[#allocation7 + $0x18] sm:$0xf]
        %v127 = vld [vmem:[#allocation7 + $0x1c] sm:$0xf]
        %p128 = scmp.eq.s32.totalorder %s18, 0
        %p129 = scmp.eq.s32.totalorder %s19, 0
        %p130 = pnand %p128, %p129
        %p131 = pneg %p130
        // Predicated region
        $region29: #{tpu_custom_call.1} parent=23 // pred_check
          _
        $region30: #{tpu_custom_call.1} parent=23 // pred_check_branch
          %133 = sbr.rel (%p130) target = $region32
        $region31: #{tpu_custom_call.1} parent=23 // pred_region
          %v134 = vunpack.c.l.bf16 %v120
          %135 = vst [vmem:[#allocation2] sm:$0xff] %v134
        $region32: #{tpu_custom_call.1} parent=23 // pred_fallthru
          _
        // Predicated region
        $region33: #{tpu_custom_call.1} parent=23 // pred_check
          %p136 = pneg %p129
        $region34: #{tpu_custom_call.1} parent=23 // pred_check_branch
          %138 = sbr.rel (%p136) target = $region36
        $region35: #{tpu_custom_call.1} parent=23 // pred_region
          %v139 = vld [vmem:[#allocation2] sm:$0xff]
          %v140 = vmul.f32 %v139, -2.0
          %v141 = vpack.c.bf16 %v140, %v140
          %142 = vst [vmem:[#allocation3] sm:$0xf] %v141
          %v143 = vmul.f32 %v139, %v139
          %144 = vmatprep.subr.mxu0 0.0
          %145 = vmatpush1.xpose.msra.mxu0 %v143
          %146 = vmatprep.subr.mxu0 0.0
          %147 = vmatpush1.xpose.msra.mxu0 0.0
          %148 = vmatprep.subr.mxu0 0.0
          %149 = vmatpush1.xpose.msra.mxu0 0.0
          %150 = vmatprep.subr.mxu0 0.0
          %151 = vmatpush1.xpose.msra.mxu0 0.0
          %152 = vmatprep.subr.mxu0 0.0
          %153 = vmatpush1.xpose.msra.mxu0 0.0
          %154 = vmatprep.subr.mxu0 0.0
          %155 = vmatpush1.xpose.msra.mxu0 0.0
          %156 = vmatprep.subr.mxu0 0.0
          %157 = vmatpush1.xpose.msra.mxu0 0.0
          %158 = vmatprep.subr.mxu0 0.0
          %159 = vmatpush1.xpose.msra.mxu0 0.0
          %160 = vmatprep.subr.mxu0 0.0
          %161 = vmatpush1.xpose.msra.mxu0 0.0
          %162 = vmatprep.subr.mxu0 0.0
          %163 = vmatpush1.xpose.msra.mxu0 0.0
          %164 = vmatprep.subr.mxu0 0.0
          %165 = vmatpush1.xpose.msra.mxu0 0.0
          %166 = vmatprep.subr.mxu0 0.0
          %167 = vmatpush1.xpose.msra.mxu0 0.0
          %168 = vmatprep.subr.mxu0 0.0
          %169 = vmatpush1.xpose.msra.mxu0 0.0
          %170 = vmatprep.subr.mxu0 0.0
          %171 = vmatpush1.xpose.msra.mxu0 0.0
          %172 = vmatprep.subr.mxu0 0.0
          %173 = vmatpush1.xpose.msra.mxu0 0.0
          %174 = vmatprep.subr.mxu0 0.0
          %175 = vmatpush1.xpose.msra.mxu0 0.0
          %176 = vmatprep.subr.mxu0 0.0
          %177 = vmatpush1.xpose.msra.mxu0 0.0
          %178 = vmatprep.subr.mxu0 0.0
          %179 = vmatpush1.xpose.msra.mxu0 0.0
          %180 = vmatprep.subr.mxu0 0.0
          %181 = vmatpush1.xpose.msra.mxu0 0.0
          %182 = vmatprep.subr.mxu0 0.0
          %183 = vmatpush1.xpose.msra.mxu0 0.0
          %184 = vmatprep.subr.mxu0 0.0
          %185 = vmatpush1.xpose.msra.mxu0 0.0
          %186 = vmatprep.subr.mxu0 0.0
          %187 = vmatpush1.xpose.msra.mxu0 0.0
          %188 = vmatprep.subr.mxu0 0.0
          %189 = vmatpush1.xpose.msra.mxu0 0.0
          %190 = vmatprep.subr.mxu0 0.0
          %191 = vmatpush1.xpose.msra.mxu0 0.0
          %192 = vmatprep.subr.mxu0 0.0
          %193 = vmatpush1.xpose.msra.mxu0 0.0
          %194 = vmatprep.subr.mxu0 0.0
          %195 = vmatpush1.xpose.msra.mxu0 0.0
          %196 = vmatprep.subr.mxu0 0.0
          %197 = vmatpush1.xpose.msra.mxu0 0.0
          %198 = vmatprep.subr.mxu0 0.0
          %199 = vmatpush1.xpose.msra.mxu0 0.0
          %200 = vmatprep.subr.mxu0 0.0
          %201 = vmatpush1.xpose.msra.mxu0 0.0
          %202 = vmatprep.subr.mxu0 0.0
          %203 = vmatpush1.xpose.msra.mxu0 0.0
          %204 = vmatprep.subr.mxu0 0.0
          %205 = vmatpush1.xpose.msra.mxu0 0.0
          %206 = vmatprep.subr.mxu0 0.0
          %207 = vmatpush1.xpose.msra.mxu0 0.0
          %208 = vmatprep.mubr.f32.mxu0 0.0
          %209 = vmatmul.mubr.f32.gmra.mrb[0].mxu0 1.0
          %v210 = vpop.f32.mrb[0].mxu0
          %v211 = vadd.f32 0.0, %v210
          %v212 = vpop.f32.mrb[0].mxu0
          %213 = vdwg.mxu0
          %vm214 = vcmask 64512
          %215 = vst.msk [vmem:[#allocation4] sm:$0xff] %vm214, %v211
          %216 = vst [vmem:[#allocation5] sm:$0xff] 0.0
          %vm217 = vcmask 57344
          %218 = vst.msk [vmem:[#allocation6] sm:$0x1] %vm217, 0.0
        $region36: #{tpu_custom_call.1} parent=23 // pred_fallthru
          _
        %v219 = vld [vmem:[#allocation3] sm:$0xf]
        %v220 = vld [vmem:[#allocation4] sm:$0xff]
        %v221 = vlaneseq
        %v222 = vshrl.u32 %v221, 7
        %v223 = vsub.s32 0, %v222
        %v224 = vrot.slane %v220, %v223
        %v233 = vunpack.c.l.b16 %v120
        %v234 = vunpack.c.l.b16 %v121
        %v235 = vunpack.c.l.b16 %v122
        %v236 = vunpack.c.l.b16 %v123
        %v237 = vunpack.c.l.b16 %v124
        %v238 = vunpack.c.l.b16 %v125
        %v239 = vunpack.c.l.b16 %v126
        %v240 = vunpack.c.l.b16 %v127
        %v241 = vpack.c.b16 %v234, %v233
        %v242 = vpack.c.b16 %v236, %v235
        %v243 = vpack.c.b16 %v238, %v237
        %v244 = vpack.c.b16 %v240, %v239
        %249 = vmatprep.subr.bf16.mxu0 0
        %250 = vmatpush1.bf16.xpose.msra.mxu0 %v219
        %251 = vmatprep.subr.bf16.mxu0 0
        %252 = vmatpush1.bf16.xpose.msra.mxu0 0
        %253 = vmatprep.subr.bf16.mxu0 0
        %254 = vmatpush1.bf16.xpose.msra.mxu0 0
        %255 = vmatprep.subr.bf16.mxu0 0
        %256 = vmatpush1.bf16.xpose.msra.mxu0 0
        %257 = vmatprep.subr.bf16.mxu0 0
        %258 = vmatpush1.bf16.xpose.msra.mxu0 0
        %259 = vmatprep.subr.bf16.mxu0 0
        %260 = vmatpush1.bf16.xpose.msra.mxu0 0
        %261 = vmatprep.subr.bf16.mxu0 0
        %262 = vmatpush1.bf16.xpose.msra.mxu0 0
        %263 = vmatprep.subr.bf16.mxu0 0
        %264 = vmatpush1.bf16.xpose.msra.mxu0 0
        %265 = vmatprep.subr.bf16.mxu0 0
        %266 = vmatpush1.bf16.xpose.msra.mxu0 0
        %267 = vmatprep.subr.bf16.mxu0 0
        %268 = vmatpush1.bf16.xpose.msra.mxu0 0
        %269 = vmatprep.subr.bf16.mxu0 0
        %270 = vmatpush1.bf16.xpose.msra.mxu0 0
        %271 = vmatprep.subr.bf16.mxu0 0
        %272 = vmatpush1.bf16.xpose.msra.mxu0 0
        %273 = vmatprep.subr.bf16.mxu0 0
        %274 = vmatpush1.bf16.xpose.msra.mxu0 0
        %275 = vmatprep.subr.bf16.mxu0 0
        %276 = vmatpush1.bf16.xpose.msra.mxu0 0
        %277 = vmatprep.subr.bf16.mxu0 0
        %278 = vmatpush1.bf16.xpose.msra.mxu0 0
        %279 = vmatprep.subr.bf16.mxu0 0
        %280 = vmatpush1.bf16.xpose.msra.mxu0 0
        %281 = vmatprep.mubr.bf16.mxu0 0
        %282 = vmatmul.mubr.bf16.gmra.mrb[0].mxu0 %v241
        %v283 = vpop.f32.mrb[0].mxu0
        %v284 = vadd.f32 %v224, %v283
        %v285 = vpop.f32.mrb[0].mxu0
        %v286 = vpop.f32.mrb[0].mxu0
        %v287 = vadd.f32 %v224, %v286
        %v288 = vpop.f32.mrb[0].mxu0
        %289 = vmatprep.mubr.bf16.mxu0 0
        %290 = vmatmul.mubr.bf16.gmra.mrb[0].mxu0 %v242
        %v291 = vpop.f32.mrb[0].mxu0
        %v292 = vadd.f32 %v224, %v291
        %v293 = vpop.f32.mrb[0].mxu0
        %v294 = vpop.f32.mrb[0].mxu0
        %v295 = vadd.f32 %v224, %v294
        %v296 = vpop.f32.mrb[0].mxu0
        %297 = vmatprep.mubr.bf16.mxu0 0
        %298 = vmatmul.mubr.bf16.gmra.mrb[0].mxu0 %v243
        %v299 = vpop.f32.mrb[0].mxu0
        %v300 = vadd.f32 %v224, %v299
        %v301 = vpop.f32.mrb[0].mxu0
        %v302 = vpop.f32.mrb[0].mxu0
        %v303 = vadd.f32 %v224, %v302
        %v304 = vpop.f32.mrb[0].mxu0
        %305 = vmatprep.mubr.bf16.mxu0 0
        %306 = vmatmul.mubr.bf16.gmra.mrb[0].mxu0 %v244
        %v307 = vpop.f32.mrb[0].mxu0
        %v308 = vadd.f32 %v224, %v307
        %v309 = vpop.f32.mrb[0].mxu0
        %v310 = vpop.f32.mrb[0].mxu0
        %v311 = vadd.f32 %v224, %v310
        %v312 = vpop.f32.mrb[0].mxu0
        %313 = vdwg.mxu0
        %v314 = vlaneseq
        %v315 = vand.u32 %v314, 127
        %vm316 = vcmp.ge.s32.totalorder %v315, 4
        %v317 = vsel %vm316, 3e+38, %v284
        %v318 = vsel %vm316, 3e+38, %v287
        %v319 = vsel %vm316, 3e+38, %v292
        %v320 = vsel %vm316, 3e+38, %v295
        %v321 = vsel %vm316, 3e+38, %v300
        %v322 = vsel %vm316, 3e+38, %v303
        %v323 = vsel %vm316, 3e+38, %v308
        %v324 = vsel %vm316, 3e+38, %v311
        %vm325 = vcmask 64512
        %v326 = vsel %vm325, %v317, inf
        %327 = vmin.xlane.f32.xlu0 %v326
        %v328 = vpop.xlane.xlu0 %327
        %v329 = vsel %vm325, %v318, inf
        %330 = vmin.xlane.f32.xlu0 %v329
        %v331 = vpop.xlane.xlu0 %330
        %v332 = vsel %vm325, %v319, inf
        %333 = vmin.xlane.f32.xlu0 %v332
        %v334 = vpop.xlane.xlu0 %333
        %v335 = vsel %vm325, %v320, inf
        %336 = vmin.xlane.f32.xlu0 %v335
        %v337 = vpop.xlane.xlu0 %336
        %v338 = vsel %vm325, %v321, inf
        %339 = vmin.xlane.f32.xlu0 %v338
        %v340 = vpop.xlane.xlu0 %339
        %v341 = vsel %vm325, %v322, inf
        %342 = vmin.xlane.f32.xlu0 %v341
        %v343 = vpop.xlane.xlu0 %342
        %v344 = vsel %vm325, %v323, inf
        %345 = vmin.xlane.f32.xlu0 %v344
        %v346 = vpop.xlane.xlu0 %345
        %v347 = vsel %vm325, %v324, inf
        %348 = vmin.xlane.f32.xlu0 %v347
        %v349 = vpop.xlane.xlu0 %348
        %vm350 = vcmp.le.f32.partialorder %v317, %v328
        %vm351 = vcmp.le.f32.partialorder %v318, %v331
        %vm352 = vcmp.le.f32.partialorder %v319, %v334
        %vm353 = vcmp.le.f32.partialorder %v320, %v337
        %vm354 = vcmp.le.f32.partialorder %v321, %v340
        %vm355 = vcmp.le.f32.partialorder %v322, %v343
        %vm356 = vcmp.le.f32.partialorder %v323, %v346
        %vm357 = vcmp.le.f32.partialorder %v324, %v349
        %v358 = vsel %vm350, %v315, 8
        %v359 = vsel %vm351, %v315, 8
        %v360 = vsel %vm352, %v315, 8
        %v361 = vsel %vm353, %v315, 8
        %v362 = vsel %vm354, %v315, 8
        %v363 = vsel %vm355, %v315, 8
        %v364 = vsel %vm356, %v315, 8
        %v365 = vsel %vm357, %v315, 8
        %v366 = vsel %vm325, %v358, 2147483647
        %v367 = vand.u32 %v366, 65535
        %v368 = vshra.s32 %v366, 16
        %v369 = vcvt.s32.f32 %v367
        %v370 = vcvt.s32.f32 %v368
        %371 = vmin.xlane.f32.xlu0 %v370
        %v372 = vpop.xlane.xlu0 %371
        %vm373 = vcmp.eq.f32.partialorder %v370, %v372
        %v374 = vsel %vm373, %v369, inf
        %375 = vmin.xlane.f32.xlu0 %v374
        %v376 = vpop.xlane.xlu0 %375
        %v377 = vcvt.f32.s32 %v376
        %v378 = vcvt.f32.s32 %v372
        %v379 = vshll.u32 %v378, 16
        %v380 = vadd.s32 %v379, %v377
        %v381 = vsel %vm325, %v359, 2147483647
        %v382 = vand.u32 %v381, 65535
        %v383 = vshra.s32 %v381, 16
        %v384 = vcvt.s32.f32 %v382
        %v385 = vcvt.s32.f32 %v383
        %386 = vmin.xlane.f32.xlu0 %v385
        %v387 = vpop.xlane.xlu0 %386
        %vm388 = vcmp.eq.f32.partialorder %v385, %v387
        %v389 = vsel %vm388, %v384, inf
        %390 = vmin.xlane.f32.xlu0 %v389
        %v391 = vpop.xlane.xlu0 %390
        %v392 = vcvt.f32.s32 %v391
        %v393 = vcvt.f32.s32 %v387
        %v394 = vshll.u32 %v393, 16
        %v395 = vadd.s32 %v394, %v392
        %v396 = vsel %vm325, %v360, 2147483647
        %v397 = vand.u32 %v396, 65535
        %v398 = vshra.s32 %v396, 16
        %v399 = vcvt.s32.f32 %v397
        %v400 = vcvt.s32.f32 %v398
        %401 = vmin.xlane.f32.xlu0 %v400
        %v402 = vpop.xlane.xlu0 %401
        %vm403 = vcmp.eq.f32.partialorder %v400, %v402
        %v404 = vsel %vm403, %v399, inf
        %405 = vmin.xlane.f32.xlu0 %v404
        %v406 = vpop.xlane.xlu0 %405
        %v407 = vcvt.f32.s32 %v406
        %v408 = vcvt.f32.s32 %v402
        %v409 = vshll.u32 %v408, 16
        %v410 = vadd.s32 %v409, %v407
        %v411 = vsel %vm325, %v361, 2147483647
        %v412 = vand.u32 %v411, 65535
        %v413 = vshra.s32 %v411, 16
        %v414 = vcvt.s32.f32 %v412
        %v415 = vcvt.s32.f32 %v413
        %416 = vmin.xlane.f32.xlu0 %v415
        %v417 = vpop.xlane.xlu0 %416
        %vm418 = vcmp.eq.f32.partialorder %v415, %v417
        %v419 = vsel %vm418, %v414, inf
        %420 = vmin.xlane.f32.xlu0 %v419
        %v421 = vpop.xlane.xlu0 %420
        %v422 = vcvt.f32.s32 %v421
        %v423 = vcvt.f32.s32 %v417
        %v424 = vshll.u32 %v423, 16
        %v425 = vadd.s32 %v424, %v422
        %v426 = vsel %vm325, %v362, 2147483647
        %v427 = vand.u32 %v426, 65535
        %v428 = vshra.s32 %v426, 16
        %v429 = vcvt.s32.f32 %v427
        %v430 = vcvt.s32.f32 %v428
        %431 = vmin.xlane.f32.xlu0 %v430
        %v432 = vpop.xlane.xlu0 %431
        %vm433 = vcmp.eq.f32.partialorder %v430, %v432
        %v434 = vsel %vm433, %v429, inf
        %435 = vmin.xlane.f32.xlu0 %v434
        %v436 = vpop.xlane.xlu0 %435
        %v437 = vcvt.f32.s32 %v436
        %v438 = vcvt.f32.s32 %v432
        %v439 = vshll.u32 %v438, 16
        %v440 = vadd.s32 %v439, %v437
        %v441 = vsel %vm325, %v363, 2147483647
        %v442 = vand.u32 %v441, 65535
        %v443 = vshra.s32 %v441, 16
        %v444 = vcvt.s32.f32 %v442
        %v445 = vcvt.s32.f32 %v443
        %446 = vmin.xlane.f32.xlu0 %v445
        %v447 = vpop.xlane.xlu0 %446
        %vm448 = vcmp.eq.f32.partialorder %v445, %v447
        %v449 = vsel %vm448, %v444, inf
        %450 = vmin.xlane.f32.xlu0 %v449
        %v451 = vpop.xlane.xlu0 %450
        %v452 = vcvt.f32.s32 %v451
        %v453 = vcvt.f32.s32 %v447
        %v454 = vshll.u32 %v453, 16
        %v455 = vadd.s32 %v454, %v452
        %v456 = vsel %vm325, %v364, 2147483647
        %v457 = vand.u32 %v456, 65535
        %v458 = vshra.s32 %v456, 16
        %v459 = vcvt.s32.f32 %v457
        %v460 = vcvt.s32.f32 %v458
        %461 = vmin.xlane.f32.xlu0 %v460
        %v462 = vpop.xlane.xlu0 %461
        %vm463 = vcmp.eq.f32.partialorder %v460, %v462
        %v464 = vsel %vm463, %v459, inf
        %465 = vmin.xlane.f32.xlu0 %v464
        %v466 = vpop.xlane.xlu0 %465
        %v467 = vcvt.f32.s32 %v466
        %v468 = vcvt.f32.s32 %v462
        %v469 = vshll.u32 %v468, 16
        %v470 = vadd.s32 %v469, %v467
        %v471 = vsel %vm325, %v365, 2147483647
        %v472 = vand.u32 %v471, 65535
        %v473 = vshra.s32 %v471, 16
        %v474 = vcvt.s32.f32 %v472
        %v475 = vcvt.s32.f32 %v473
        %476 = vmin.xlane.f32.xlu0 %v475
        %v477 = vpop.xlane.xlu0 %476
        %vm478 = vcmp.eq.f32.partialorder %v475, %v477
        %v479 = vsel %vm478, %v474, inf
        %480 = vmin.xlane.f32.xlu0 %v479
        %v481 = vpop.xlane.xlu0 %480
        %v482 = vcvt.f32.s32 %v481
        %v483 = vcvt.f32.s32 %v477
        %v484 = vshll.u32 %v483, 16
        %v485 = vadd.s32 %v484, %v482
        %v486 = vlaneseq
        %v487 = vshrl.u32 %v486, 7
        %v488 = vadd.s32 %v487, 8
        %v489 = vadd.s32 %v487, 16
        %v490 = vadd.s32 %v487, 24
        %v491 = vadd.s32 %v487, 32
        %v492 = vadd.s32 %v487, 40
        %v493 = vadd.s32 %v487, 48
        %v494 = vadd.s32 %v487, 56
        %s495 = smul.u32 %s19, 64
        %v496 = vstv %s495
        %v497 = vadd.s32 %v487, %v496
        %v498 = vadd.s32 %v488, %v496
        %v499 = vadd.s32 %v489, %v496
        %v500 = vadd.s32 %v490, %v496
        %v501 = vadd.s32 %v491, %v496
        %v502 = vadd.s32 %v492, %v496
        %v503 = vadd.s32 %v493, %v496
        %v504 = vadd.s32 %v494, %v496
        %vm505 = vcmp.eq.s32.totalorder %v315, %v380
        %vm506 = vcmp.eq.s32.totalorder %v315, %v395
        %vm507 = vcmp.eq.s32.totalorder %v315, %v410
        %vm508 = vcmp.eq.s32.totalorder %v315, %v425
        %vm509 = vcmp.eq.s32.totalorder %v315, %v440
        %vm510 = vcmp.eq.s32.totalorder %v315, %v455
        %vm511 = vcmp.eq.s32.totalorder %v315, %v470
        %vm512 = vcmp.eq.s32.totalorder %v315, %v485
        %vm513 = vcmp.lt.s32.totalorder %v497, 64
        %vm514 = vcmp.lt.s32.totalorder %v498, 64
        %vm515 = vcmp.lt.s32.totalorder %v499, 64
        %vm516 = vcmp.lt.s32.totalorder %v500, 64
        %vm517 = vcmp.lt.s32.totalorder %v501, 64
        %vm518 = vcmp.lt.s32.totalorder %v502, 64
        %vm519 = vcmp.lt.s32.totalorder %v503, 64
        %vm520 = vcmp.lt.s32.totalorder %v504, 64
        %vm521 = vmand %vm505, %vm513
        %vm522 = vmand %vm506, %vm514
        %vm523 = vmand %vm507, %vm515
        %vm524 = vmand %vm508, %vm516
        %vm525 = vmand %vm509, %vm517
        %vm526 = vmand %vm510, %vm518
        %vm527 = vmand %vm511, %vm519
        %vm528 = vmand %vm512, %vm520
        %v529 = vsel %vm521, 1.0, 0.0
        %v530 = vsel %vm522, 1.0, 0.0
        %v531 = vsel %vm523, 1.0, 0.0
        %v532 = vsel %vm524, 1.0, 0.0
        %v533 = vsel %vm525, 1.0, 0.0
        %v534 = vsel %vm526, 1.0, 0.0
        %v535 = vsel %vm527, 1.0, 0.0
        %v536 = vsel %vm528, 1.0, 0.0
        %v537 = vld [vmem:[#allocation5] sm:$0xff]
        %v538 = vpack.c.bf16 %v530, %v529
        %v539 = vpack.c.bf16 %v532, %v531
        %v540 = vpack.c.bf16 %v534, %v533
        %v541 = vpack.c.bf16 %v536, %v535
        %542 = vxpose.xlu0.c.b16.start [1/8] %v538, 128
        %543 = vxpose.xlu0.c.b16.cont [2/8] %v539, 128
        %544 = vxpose.xlu0.c.b16.cont [3/8] %v540, 128
        %545 = vxpose.xlu0.c.b16.cont [4/8] %v541, 128
        %546 = vxpose.xlu0.c.b16.cont [5/8] 0, 128
        %547 = vxpose.xlu0.c.b16.cont [6/8] 0, 128
        %548 = vxpose.xlu0.c.b16.cont [7/8] 0, 128
        %549 = vxpose.xlu0.c.b16.end [8/8] 0, 128
        %v550 = vpop.trf.xlu0
        %v551 = vpop.trf.xlu0
        %v552 = vpop.trf.xlu0
        %v553 = vpop.trf.xlu0
        %v554 = vpop.trf.xlu0
        %v555 = vpop.trf.xlu0
        %v556 = vpop.trf.xlu0
        %v557 = vpop.trf.xlu0
        %vm558 = vcmask 523264
        %v560 = vsel %vm558, %v550, 0
        %562 = vmatprep.subr.bf16.mxu0 0
        %563 = vmatpush1.bf16.msra.mxu0 %v241
        %564 = vmatprep.subr.bf16.mxu0 0
        %565 = vmatpush1.bf16.msra.mxu0 %v242
        %566 = vmatprep.subr.bf16.mxu0 0
        %567 = vmatpush1.bf16.msra.mxu0 %v243
        %568 = vmatprep.subr.bf16.mxu0 0
        %569 = vmatpush1.bf16.msra.mxu0 %v244
        %570 = vmatprep.subr.bf16.mxu0 0
        %571 = vmatpush1.bf16.msra.mxu0 0
        %572 = vmatprep.subr.bf16.mxu0 0
        %573 = vmatpush1.bf16.msra.mxu0 0
        %574 = vmatprep.subr.bf16.mxu0 0
        %575 = vmatpush1.bf16.msra.mxu0 0
        %576 = vmatprep.subr.bf16.mxu0 0
        %577 = vmatpush1.bf16.msra.mxu0 0
        %578 = vmatprep.subr.bf16.mxu0 0
        %579 = vmatpush1.bf16.msra.mxu0 0
        %580 = vmatprep.subr.bf16.mxu0 0
        %581 = vmatpush1.bf16.msra.mxu0 0
        %582 = vmatprep.subr.bf16.mxu0 0
        %583 = vmatpush1.bf16.msra.mxu0 0
        %584 = vmatprep.subr.bf16.mxu0 0
        %585 = vmatpush1.bf16.msra.mxu0 0
        %586 = vmatprep.subr.bf16.mxu0 0
        %587 = vmatpush1.bf16.msra.mxu0 0
        %588 = vmatprep.subr.bf16.mxu0 0
        %589 = vmatpush1.bf16.msra.mxu0 0
        %590 = vmatprep.subr.bf16.mxu0 0
        %591 = vmatpush1.bf16.msra.mxu0 0
        %592 = vmatprep.subr.bf16.mxu0 0
        %593 = vmatpush1.bf16.msra.mxu0 0
        %594 = vmatprep.mubr.bf16.mxu0 0
        %595 = vmatmul.mubr.bf16.gmra.mrb[0].mxu0 %v560
        %v596 = vpop.f32.mrb[0].mxu0
        %v597 = vadd.f32 0.0, %v596
        %v598 = vpop.f32.mrb[0].mxu0
        %v599 = vpop.f32.mrb[0].mxu0
        %v600 = vpop.f32.mrb[0].mxu0
        %601 = vdwg.mxu0
        %v602 = vadd.f32 %v537, %v597
        %603 = vst [vmem:[#allocation5] sm:$0xff] %v602
        %v604 = vld [vmem:[#allocation6] sm:$0x1]
        %v605 = vsel %vm325, %v529, 0.0
        %v606 = vsel %vm325, %v530, 0.0
        %v607 = vadd.f32 %v605, %v606
        %v608 = vsel %vm325, %v531, 0.0
        %v609 = vadd.f32 %v607, %v608
        %v610 = vsel %vm325, %v532, 0.0
        %v611 = vadd.f32 %v609, %v610
        %v612 = vsel %vm325, %v533, 0.0
        %v613 = vadd.f32 %v611, %v612
        %v614 = vsel %vm325, %v534, 0.0
        %v615 = vadd.f32 %v613, %v614
        %v616 = vsel %vm325, %v535, 0.0
        %v617 = vadd.f32 %v615, %v616
        %v618 = vsel %vm325, %v536, 0.0
        %v619 = vadd.f32 %v617, %v618
        %v620 = vrot.slane %v619, 4
        %v621 = vadd.f32 %v619, %v620
        %v622 = vrot.slane %v621, 2
        %v623 = vadd.f32 %v621, %v622
        %v624 = vrot.slane %v623, 1
        %v625 = vadd.f32 %v623, %v624
        %v626 = vadd.f32 %v604, %v625
        %vm627 = vcmask 57344
        %628 = vst.msk [vmem:[#allocation6] sm:$0x1] %vm627, %v626
        // Predicated region
        $region37: #{tpu_custom_call.1} parent=23 // pred_check
          %p629 = pneg %p129
        $region38: #{tpu_custom_call.1} parent=23 // pred_check_branch
          %631 = sbr.rel (%p629) target = $region40
        $region39: #{tpu_custom_call.1} parent=23 // pred_region
          %v632 = vld [vmem:[#allocation6] sm:$0x1]
          %vm633 = vcmp.eq.s32.totalorder %v487, %v315
          %v635 = vlaneseq
          %v636 = vshrl.u32 %v635, 7
          %v637 = vsub.s32 0, %v636
          %v638 = vrot.slane %v632, %v637
          %v640 = vsel %vm633, %v638, 0.0
          %v641 = vsel %vm325, %v640, 0.0
          %642 = vadd.xlane.f32.xlu0 %v641
          %v643 = vpop.xlane.xlu0 %642
          %v644 = vld [vmem:[#allocation2] sm:$0xff]
          %vm645 = vcmp.gt.f32.partialorder %v643, 0.5
          %v646 = vld [vmem:[#allocation5] sm:$0xff]
          %v647 = vmax.f32 %v643, 1.0
          %v648 = vrcp.pop %v647
          %v649 = vmul.f32 %v646, %v648
          %v650 = vsel %vm645, 1, 0
          %vm651 = vcmp.eq.s32.totalorder %v650, 1
          %v652 = vsel %vm651, %v649, %v644
          %653 = vst [vmem:[#allocation2] sm:$0xff] %v652
        $region40: #{tpu_custom_call.1} parent=23 // pred_fallthru
          _
        %p654 = scmp.eq.s32.totalorder %s18, 19
        %p655 = pnand %p129, %p654
        %p656 = pneg %p655
        // Predicated region
        $region41: #{tpu_custom_call.1} parent=23 // pred_check
          _
        $region42: #{tpu_custom_call.1} parent=23 // pred_check_branch
          %658 = sbr.rel (%p655) target = $region44
        $region43: #{tpu_custom_call.1} parent=23 // pred_region
          %v659 = vld [vmem:[#allocation2] sm:$0xff]
          %660 = vst [vmem:[#allocation10] sm:$0xff] %v659
        $region44: #{tpu_custom_call.1} parent=23 // pred_fallthru
          _
        // Predicated region
        $region45: #{tpu_custom_call.1} parent=23 // pred_check
          %p661 = pneg %p65
        $region46: #{tpu_custom_call.1} parent=23 // pred_check_branch
          %663 = sbr.rel (%p661) target = $region48
        $region47: #{tpu_custom_call.1} parent=23 // pred_region
          %s665 = ssub.s32 128, 128
          %666 = vsyncadd [#allocation9], %s665
          %s668 = sshll.u32 [#allocation10], 4
          %s669 = int_to_ptr.vmem [resolvable:$true] %s668
          %671 = dma.vmem_to_hbm [thread:$0]  %s669, 128, %s1, [#allocation9]
        $region48: #{tpu_custom_call.1} parent=23 // pred_fallthru
          _
        // Predicated region
        $region49: #{tpu_custom_call.1} parent=23 // pred_check
          %p672 = pneg %p65
        $region50: #{tpu_custom_call.1} parent=23 // pred_check_branch
          %674 = sbr.rel (%p672) target = $region52
        $region51: #{tpu_custom_call.1} parent=23 // pred_region
          %675 = dma.done [#allocation9], 128
        $region52: #{tpu_custom_call.1} parent=23 // pred_fallthru
          _
      $region24: #{tpu_custom_call.1} parent=5 // pred_fallthru
        _
      %p676 = scmp.le.s32.totalorder 2, %s9
      // Predicated region
      $region53: #{tpu_custom_call.1} parent=5 // pred_check
        %p677 = pneg %p676
      $region54: #{tpu_custom_call.1} parent=5 // pred_check_branch
        %679 = sbr.rel (%p677) target = $region56
      $region55: #{tpu_custom_call.1} parent=5 // pred_region
        %s680 = ssub.s32 %s9, 2
      $region56: #{tpu_custom_call.1} parent=5 // pred_fallthru
        _
    $region6: #{tpu_custom_call.1} parent=1 // loop_footer
      %s13 = sadd.s32 1, %s9
    $region7: #{tpu_custom_call.1} parent=1 // loop_footer_branch
      %8 = sbr.rel target = $region3
    $region8: #{tpu_custom_call.1} parent=1 // loop_exit
      _
    %681 = vsyncpa [#allocation8], 1
    %s682 = scalar_lea.sflag [#allocation8], 1
    %683 = vsyncpa %s682, 1
    %684 = vsyncpa [#allocation9], 1
    %s685 = scalar_lea.sflag [#allocation9], 1
    %686 = vsyncpa %s685, 1

</llo_original>
